<compile_context>
chip_gen: v5e
topology: v5e:2x2
jax: 0.10.0
libtpu: 0.0.40
codegen_flags: <defaults>
</compile_context>

<pallas_src>
import jax
import jax.numpy as jnp
from jax.experimental import pallas as pl
from jax.experimental.pallas import tpu as pltpu

IN_DIM = 2
HIDDEN = 50
OUT_DIM = 9
PACK = 2                      # samples packed per activation row
P_IN = PACK * IN_DIM          # 4
P_HID = PACK * HIDDEN         # 100
P_OUT = PACK * OUT_DIM        # 18
# MLP: 2 -> 50 -> 50 -> 50 -> 50 -> 50 -> 9, ReLU between all but the last.
LAYER_DIMS = [(IN_DIM, HIDDEN)] + [(HIDDEN, HIDDEN)] * 4 + [(HIDDEN, OUT_DIM)]


def _round_up(x, m):
    return ((x + m - 1) // m) * m


def _mlp_kernel(x_ref, w1_ref, wmid_ref, w6_ref, b1_ref, bmid_ref, b6_ref,
                o_ref):
    # x_ref: (tbp, 4) = [x0_even, x1_even, x0_odd, x1_odd] per row (2 samples).
    x = x_ref[...]
    # Layer 1 (2 -> 50 on both packed samples): four broadcast FMAs on the VPU
    # against the zero-padded packed weight rows — cheaper than a degenerate
    # MXU matmul and keeps the MXU (the binding slot) free.
    h = (x[:, 0:1] * w1_ref[0:1, :]
         + x[:, 1:2] * w1_ref[1:2, :]
         + x[:, 2:3] * w1_ref[2:3, :]
         + x[:, 3:4] * w1_ref[3:4, :]
         + b1_ref[...])
    h = jnp.maximum(h, 0.0)
    # Hidden layers 2..5 (50 -> 50 on both halves): block-diagonal (100,100)
    # bf16 weights -> one MXU pass per layer, f32 accumulation, VPU bias/ReLU.
    for i in range(4):
        h = jnp.dot(h.astype(jnp.bfloat16), wmid_ref[i],
                    preferred_element_type=jnp.float32)
        h = jnp.maximum(h + bmid_ref[i:i + 1, :], 0.0)
    # Output layer (50 -> 9 on both halves), no activation.
    # NOTE: (tbp, 18) is still a lane-sparse store; revisit only if the bundle
    # dump shows vst.msk surfacing now that MXU time has dropped.
    o_ref[...] = (jnp.dot(h.astype(jnp.bfloat16), w6_ref[...],
                          preferred_element_type=jnp.float32)
                  + b6_ref[...])


def pack_params(params):
    """Pack the 6 (W, b) pairs for the 2-samples-per-row kernel layout:
      w1p   (4, 100)      f32  : w1 in [0:2, 0:50] and [2:4, 50:100], zeros else
      wmidp (4, 100, 100) bf16 : block-diag(W_i, W_i) for layers 2..5
      w6p   (100, 18)     bf16 : block-diag(W6, W6)
      b1p (1,100), bmidp (4,100), b6p (1,18)  f32 : biases tiled twice.
    bf16 storage feeds the MXU natively; accumulation stays f32."""
    ps = [(jnp.asarray(w, jnp.float32), jnp.asarray(b, jnp.float32).reshape(1, -1))
          for (w, b) in params]
    (w1, b1), (w2, b2), (w3, b3), (w4, b4), (w5, b5), (w6, b6) = ps

    w1p = jnp.zeros((P_IN, P_HID), jnp.float32)
    w1p = w1p.at[0:IN_DIM, 0:HIDDEN].set(w1)
    w1p = w1p.at[IN_DIM:2 * IN_DIM, HIDDEN:2 * HIDDEN].set(w1)

    def blockdiag2(w):
        f_in, f_out = w.shape
        out = jnp.zeros((2 * f_in, 2 * f_out), jnp.float32)
        out = out.at[0:f_in, 0:f_out].set(w)
        out = out.at[f_in:, f_out:].set(w)
        return out

    wmidp = jnp.stack([blockdiag2(w) for w in (w2, w3, w4, w5)],
                      axis=0).astype(jnp.bfloat16)
    w6p = blockdiag2(w6).astype(jnp.bfloat16)

    b1p = jnp.concatenate([b1, b1], axis=1)
    bmidp = jnp.concatenate(
        [jnp.concatenate([b, b], axis=1) for b in (b2, b3, b4, b5)], axis=0)
    b6p = jnp.concatenate([b6, b6], axis=1)
    return (w1p, wmidp, w6p, b1p, bmidp, b6p)


def _tensorcores_per_chip():
    """2 for dual-TensorCore chips (v4 / v5p / v7x), else 1."""
    try:
        kind = jax.devices()[0].device_kind.lower()
    except Exception:
        return 1
    return 2 if ("v4" in kind or "v5p" in kind or "v7" in kind) else 1


def discriminator_forward(a, packed_params, *, block_n=2048):
    """Forward pass of Discriminator.

    a: tuple of arrays concatenated along axis 1 (like torch.cat(a, 1)); the
       concatenation must have exactly 2 feature columns.
    packed_params: output of pack_params().
    block_n: max batch-tile rows in original samples (sweep 512..4096 at large N).
    """
    cols = []
    for arr in a:
        arr = jnp.asarray(arr, jnp.float32)
        cols.append(arr[:, None] if arr.ndim == 1 else arr)
    x = jnp.concatenate(cols, axis=1)                       # (n, 2) cheap XLA concat
    n = x.shape[0]
    assert x.shape[1] == IN_DIM, f"expected {IN_DIM} input features, got {x.shape[1]}"

    # Pad so two samples pack per row and packed rows hit the 8-row sublane
    # granule. Pad rows are zeros and are clipped after the call.
    n_pad = _round_up(max(n, 1), PACK * 8)
    if n_pad != n:
        x = jnp.pad(x, ((0, n_pad - n), (0, 0)))
    np_rows = n_pad // PACK
    # (n_pad, 2) -> (np_rows, 4): row r = [x[2r,0], x[2r,1], x[2r+1,0], x[2r+1,1]]
    xp = x.reshape(np_rows, P_IN)

    # Tile sizing in packed rows. Single-TC chips (v5e/v6e): take the biggest
    # tile block_n allows. Dual-TC chips (v4/v5p/v7x): force an even number of
    # grid steps so the "parallel" axis shards evenly across both cores.
    tbp = _round_up(max(8, min(block_n // PACK, np_rows)), 8)
    if _tensorcores_per_chip() > 1:
        steps = pl.cdiv(np_rows, tbp)
        if steps % 2:
            steps += 1
        tbp = _round_up(max(8, pl.cdiv(np_rows, steps)), 8)
    grid = (pl.cdiv(np_rows, tbp),)

    w1p, wmidp, w6p, b1p, bmidp, b6p = packed_params

    batch_map = lambda i: (i, 0)
    in_specs = [
        pl.BlockSpec((tbp, P_IN), batch_map),              # packed inputs (tbp, 4)
        pl.BlockSpec(w1p.shape, lambda i: (0, 0)),         # W1 packed   (4, 100)
        pl.BlockSpec(wmidp.shape, lambda i: (0, 0, 0)),    # W2..W5 bdiag (4,100,100)
        pl.BlockSpec(w6p.shape, lambda i: (0, 0)),         # W6 bdiag    (100, 18)
        pl.BlockSpec(b1p.shape, lambda i: (0, 0)),         # b1 packed   (1, 100)
        pl.BlockSpec(bmidp.shape, lambda i: (0, 0)),       # b2..b5      (4, 100)
        pl.BlockSpec(b6p.shape, lambda i: (0, 0)),         # b6 packed   (1, 18)
    ]
    out_spec = pl.BlockSpec((tbp, P_OUT), batch_map)

    flops = 2 * n_pad * (IN_DIM * HIDDEN + 4 * HIDDEN * HIDDEN + HIDDEN * OUT_DIM)
    param_bytes = sum(int(p.size) * p.dtype.itemsize for p in packed_params)
    bytes_accessed = n_pad * IN_DIM * 4 + n_pad * OUT_DIM * 4 + param_bytes

    o_packed = pl.pallas_call(
        _mlp_kernel,
        out_shape=jax.ShapeDtypeStruct((np_rows, P_OUT), jnp.float32),
        grid_spec=pltpu.PrefetchScalarGridSpec(
            num_scalar_prefetch=0,
            grid=grid,
            in_specs=in_specs,
            out_specs=out_spec,
        ),
        compiler_params=pltpu.CompilerParams(
            dimension_semantics=("parallel",),
            # v5e's scoped default is 16 MiB; usage here is a few MiB, but keep
            # headroom explicit so large block_n sweeps never hit the default.
            vmem_limit_bytes=32 << 20,
        ),
        cost_estimate=pl.CostEstimate(
            flops=flops, transcendentals=0, bytes_accessed=bytes_accessed),
    )(xp, w1p, wmidp, w6p, b1p, bmidp, b6p)

    # De-interleave the two packed samples per row and clip the batch pad.
    return o_packed.reshape(n_pad, OUT_DIM)[:n]


def init_params(key):
    """Deterministic init mimicking torch.nn.Linear's U(-1/sqrt(fan_in), +...)."""
    params = []
    for (fan_in, fan_out) in LAYER_DIMS:
        key, kw, kb = jax.random.split(key, 3)
        bound = 1.0 / jnp.sqrt(jnp.float32(fan_in))
        w = jax.random.uniform(kw, (fan_in, fan_out), jnp.float32, -bound, bound)
        b = jax.random.uniform(kb, (1, fan_out), jnp.float32, -bound, bound)
        params.append((w, b))
    return params


def _reference_forward(a, params):
    """Pure-JAX f32 reference with the module's math (cat -> 6 Linear, ReLU)."""
    h = jnp.concatenate([jnp.asarray(v, jnp.float32) for v in a], axis=1)
    for i, (w, b) in enumerate(params):
        h = h @ w + b
        if i < len(params) - 1:
            h = jnp.maximum(h, 0.0)
    return h


if __name__ == "__main__":
    key = jax.random.PRNGKey(0)
    k_params, k_x, k_t = jax.random.split(key, 3)

    params = init_params(k_params)
    packed = pack_params(params)

    # forward(a) expects a tuple concatenated along dim 1 -> (N, 2),
    # e.g. a spatial-coordinate column and a time column.
    n = 8
    x_col = jax.random.uniform(k_x, (n, 1), jnp.float32)
    t_col = jax.random.uniform(k_t, (n, 1), jnp.float32)
    a = (x_col, t_col)

    out = jax.block_until_ready(discriminator_forward(a, packed))
    ref = _reference_forward(a, params)
    assert out.shape == (n, OUT_DIM), out.shape
    # Tolerance covers bf16 MXU operands (f32 accumulation) vs the f32 reference.
    assert jnp.allclose(out, ref, atol=2e-2, rtol=2e-2), "mismatch vs JAX reference (n=8)"

    # Ragged odd batch with a multi-step grid: exercises the batch pad, the
    # 2-sample packing / de-interleave, and Pallas partial-tile clipping.
    n2 = 301
    k_x2, k_t2 = jax.random.split(k_t)
    a2 = (jax.random.uniform(k_x2, (n2, 1), jnp.float32),
          jax.random.uniform(k_t2, (n2, 1), jnp.float32))
    out2 = jax.block_until_ready(discriminator_forward(a2, packed, block_n=128))
    ref2 = _reference_forward(a2, params)
    assert out2.shape == (n2, OUT_DIM), out2.shape
    assert jnp.allclose(out2, ref2, atol=2e-2, rtol=2e-2), "mismatch vs JAX reference (n=301)"

    print("KERNEL_OK")
</pallas_src>

<mosaic_0001>
module attributes {stable_mosaic.version = 11 : i64} {
  func.func @_mlp_kernel(%arg0: i32, %arg1: memref<8x4xf32, #tpu.memory_space<vmem>>, %arg2: memref<4x100xf32, #tpu.memory_space<vmem>>, %arg3: memref<4x100x100xbf16, #tpu.memory_space<vmem>>, %arg4: memref<100x18xbf16, #tpu.memory_space<vmem>>, %arg5: memref<1x100xf32, #tpu.memory_space<vmem>>, %arg6: memref<4x100xf32, #tpu.memory_space<vmem>>, %arg7: memref<1x18xf32, #tpu.memory_space<vmem>>, %arg8: memref<8x18xf32, #tpu.memory_space<vmem>>) attributes {dimension_semantics = [#tpu.dimension_semantics<parallel>], iteration_bounds = array<i64: 1>, scalar_prefetch = 0 : i64, scratch_operands = 0 : i64, tpu.core_type = #tpu.core_type<tc>, window_params = [{transform_indices = @transform_0, window_bounds = array<i64: 8, 4>}, {pipeline_mode = #tpu.pipeline_mode<synchronous>, transform_indices = @transform_1, window_bounds = array<i64: 4, 100>}, {pipeline_mode = #tpu.pipeline_mode<synchronous>, transform_indices = @transform_2, window_bounds = array<i64: 4, 100, 100>}, {pipeline_mode = #tpu.pipeline_mode<synchronous>, transform_indices = @transform_3, window_bounds = array<i64: 100, 18>}, {pipeline_mode = #tpu.pipeline_mode<synchronous>, transform_indices = @transform_4, window_bounds = array<i64: 1, 100>}, {pipeline_mode = #tpu.pipeline_mode<synchronous>, transform_indices = @transform_5, window_bounds = array<i64: 4, 100>}, {pipeline_mode = #tpu.pipeline_mode<synchronous>, transform_indices = @transform_6, window_bounds = array<i64: 1, 18>}, {transform_indices = @transform_7, window_bounds = array<i64: 8, 18>}]} {
    %c0 = arith.constant 0 : index
    %c0_0 = arith.constant 0 : index
    %0 = vector.load %arg1[%c0, %c0_0] : memref<8x4xf32, #tpu.memory_space<vmem>>, vector<8x4xf32>
    %1 = vector.extract_strided_slice %0 {offsets = [0, 0], sizes = [8, 1], strides = [1, 1]} : vector<8x4xf32> to vector<8x1xf32>
    %c0_1 = arith.constant 0 : index
    %c0_2 = arith.constant 0 : index
    %2 = vector.load %arg2[%c0_1, %c0_2] : memref<4x100xf32, #tpu.memory_space<vmem>>, vector<1x100xf32>
    %3 = vector.broadcast %1 : vector<8x1xf32> to vector<8x100xf32>
    %4 = vector.broadcast %2 : vector<1x100xf32> to vector<8x100xf32>
    %5 = arith.mulf %3, %4 : vector<8x100xf32>
    %6 = vector.extract_strided_slice %0 {offsets = [0, 1], sizes = [8, 1], strides = [1, 1]} : vector<8x4xf32> to vector<8x1xf32>
    %c1 = arith.constant 1 : index
    %c0_3 = arith.constant 0 : index
    %7 = vector.load %arg2[%c1, %c0_3] : memref<4x100xf32, #tpu.memory_space<vmem>>, vector<1x100xf32>
    %8 = vector.broadcast %6 : vector<8x1xf32> to vector<8x100xf32>
    %9 = vector.broadcast %7 : vector<1x100xf32> to vector<8x100xf32>
    %10 = arith.mulf %8, %9 : vector<8x100xf32>
    %11 = arith.addf %5, %10 : vector<8x100xf32>
    %12 = vector.extract_strided_slice %0 {offsets = [0, 2], sizes = [8, 1], strides = [1, 1]} : vector<8x4xf32> to vector<8x1xf32>
    %c2 = arith.constant 2 : index
    %c0_4 = arith.constant 0 : index
    %13 = vector.load %arg2[%c2, %c0_4] : memref<4x100xf32, #tpu.memory_space<vmem>>, vector<1x100xf32>
    %14 = vector.broadcast %12 : vector<8x1xf32> to vector<8x100xf32>
    %15 = vector.broadcast %13 : vector<1x100xf32> to vector<8x100xf32>
    %16 = arith.mulf %14, %15 : vector<8x100xf32>
    %17 = arith.addf %11, %16 : vector<8x100xf32>
    %18 = vector.extract_strided_slice %0 {offsets = [0, 3], sizes = [8, 1], strides = [1, 1]} : vector<8x4xf32> to vector<8x1xf32>
    %c3 = arith.constant 3 : index
    %c0_5 = arith.constant 0 : index
    %19 = vector.load %arg2[%c3, %c0_5] : memref<4x100xf32, #tpu.memory_space<vmem>>, vector<1x100xf32>
    %20 = vector.broadcast %18 : vector<8x1xf32> to vector<8x100xf32>
    %21 = vector.broadcast %19 : vector<1x100xf32> to vector<8x100xf32>
    %22 = arith.mulf %20, %21 : vector<8x100xf32>
    %23 = arith.addf %17, %22 : vector<8x100xf32>
    %c0_6 = arith.constant 0 : index
    %c0_7 = arith.constant 0 : index
    %24 = vector.load %arg5[%c0_6, %c0_7] : memref<1x100xf32, #tpu.memory_space<vmem>>, vector<1x100xf32>
    %25 = vector.broadcast %24 : vector<1x100xf32> to vector<8x100xf32>
    %26 = arith.addf %23, %25 : vector<8x100xf32>
    %cst = arith.constant 0.000000e+00 : f32
    %27 = vector.broadcast %cst : f32 to vector<8x100xf32>
    %28 = arith.maximumf %26, %27 : vector<8x100xf32>
    %29 = arith.truncf %28 : vector<8x100xf32> to vector<8x100xbf16>
    %c0_8 = arith.constant 0 : index
    %c0_9 = arith.constant 0 : index
    %c0_10 = arith.constant 0 : index
    %30 = vector.load %arg3[%c0_8, %c0_9, %c0_10] : memref<4x100x100xbf16, #tpu.memory_space<vmem>>, vector<1x100x100xbf16>
    %31 = vector.shape_cast %30 : vector<1x100x100xbf16> to vector<100x100xbf16>
    %cst_11 = arith.constant dense<0.000000e+00> : vector<8x100xf32>
    %32 = tpu.matmul %29, %31, %cst_11 {dimension_numbers = #tpu.dot_dimension_numbers<[1], [0], [0], [1], [0, 0, 1, 1], [], []>} : vector<8x100xbf16>, vector<100x100xbf16>, vector<8x100xf32> -> vector<8x100xf32>
    %c0_12 = arith.constant 0 : index
    %c0_13 = arith.constant 0 : index
    %33 = vector.load %arg6[%c0_12, %c0_13] : memref<4x100xf32, #tpu.memory_space<vmem>>, vector<1x100xf32>
    %34 = vector.broadcast %33 : vector<1x100xf32> to vector<8x100xf32>
    %35 = arith.addf %32, %34 : vector<8x100xf32>
    %cst_14 = arith.constant 0.000000e+00 : f32
    %36 = vector.broadcast %cst_14 : f32 to vector<8x100xf32>
    %37 = arith.maximumf %35, %36 : vector<8x100xf32>
    %38 = arith.truncf %37 : vector<8x100xf32> to vector<8x100xbf16>
    %c1_15 = arith.constant 1 : index
    %c0_16 = arith.constant 0 : index
    %c0_17 = arith.constant 0 : index
    %39 = vector.load %arg3[%c1_15, %c0_16, %c0_17] : memref<4x100x100xbf16, #tpu.memory_space<vmem>>, vector<1x100x100xbf16>
    %40 = vector.shape_cast %39 : vector<1x100x100xbf16> to vector<100x100xbf16>
    %cst_18 = arith.constant dense<0.000000e+00> : vector<8x100xf32>
    %41 = tpu.matmul %38, %40, %cst_18 {dimension_numbers = #tpu.dot_dimension_numbers<[1], [0], [0], [1], [0, 0, 1, 1], [], []>} : vector<8x100xbf16>, vector<100x100xbf16>, vector<8x100xf32> -> vector<8x100xf32>
    %c1_19 = arith.constant 1 : index
    %c0_20 = arith.constant 0 : index
    %42 = vector.load %arg6[%c1_19, %c0_20] : memref<4x100xf32, #tpu.memory_space<vmem>>, vector<1x100xf32>
    %43 = vector.broadcast %42 : vector<1x100xf32> to vector<8x100xf32>
    %44 = arith.addf %41, %43 : vector<8x100xf32>
    %cst_21 = arith.constant 0.000000e+00 : f32
    %45 = vector.broadcast %cst_21 : f32 to vector<8x100xf32>
    %46 = arith.maximumf %44, %45 : vector<8x100xf32>
    %47 = arith.truncf %46 : vector<8x100xf32> to vector<8x100xbf16>
    %c2_22 = arith.constant 2 : index
    %c0_23 = arith.constant 0 : index
    %c0_24 = arith.constant 0 : index
    %48 = vector.load %arg3[%c2_22, %c0_23, %c0_24] : memref<4x100x100xbf16, #tpu.memory_space<vmem>>, vector<1x100x100xbf16>
    %49 = vector.shape_cast %48 : vector<1x100x100xbf16> to vector<100x100xbf16>
    %cst_25 = arith.constant dense<0.000000e+00> : vector<8x100xf32>
    %50 = tpu.matmul %47, %49, %cst_25 {dimension_numbers = #tpu.dot_dimension_numbers<[1], [0], [0], [1], [0, 0, 1, 1], [], []>} : vector<8x100xbf16>, vector<100x100xbf16>, vector<8x100xf32> -> vector<8x100xf32>
    %c2_26 = arith.constant 2 : index
    %c0_27 = arith.constant 0 : index
    %51 = vector.load %arg6[%c2_26, %c0_27] : memref<4x100xf32, #tpu.memory_space<vmem>>, vector<1x100xf32>
    %52 = vector.broadcast %51 : vector<1x100xf32> to vector<8x100xf32>
    %53 = arith.addf %50, %52 : vector<8x100xf32>
    %cst_28 = arith.constant 0.000000e+00 : f32
    %54 = vector.broadcast %cst_28 : f32 to vector<8x100xf32>
    %55 = arith.maximumf %53, %54 : vector<8x100xf32>
    %56 = arith.truncf %55 : vector<8x100xf32> to vector<8x100xbf16>
    %c3_29 = arith.constant 3 : index
    %c0_30 = arith.constant 0 : index
    %c0_31 = arith.constant 0 : index
    %57 = vector.load %arg3[%c3_29, %c0_30, %c0_31] : memref<4x100x100xbf16, #tpu.memory_space<vmem>>, vector<1x100x100xbf16>
    %58 = vector.shape_cast %57 : vector<1x100x100xbf16> to vector<100x100xbf16>
    %cst_32 = arith.constant dense<0.000000e+00> : vector<8x100xf32>
    %59 = tpu.matmul %56, %58, %cst_32 {dimension_numbers = #tpu.dot_dimension_numbers<[1], [0], [0], [1], [0, 0, 1, 1], [], []>} : vector<8x100xbf16>, vector<100x100xbf16>, vector<8x100xf32> -> vector<8x100xf32>
    %c3_33 = arith.constant 3 : index
    %c0_34 = arith.constant 0 : index
    %60 = vector.load %arg6[%c3_33, %c0_34] : memref<4x100xf32, #tpu.memory_space<vmem>>, vector<1x100xf32>
    %61 = vector.broadcast %60 : vector<1x100xf32> to vector<8x100xf32>
    %62 = arith.addf %59, %61 : vector<8x100xf32>
    %cst_35 = arith.constant 0.000000e+00 : f32
    %63 = vector.broadcast %cst_35 : f32 to vector<8x100xf32>
    %64 = arith.maximumf %62, %63 : vector<8x100xf32>
    %65 = arith.truncf %64 : vector<8x100xf32> to vector<8x100xbf16>
    %c0_36 = arith.constant 0 : index
    %c0_37 = arith.constant 0 : index
    %66 = vector.load %arg4[%c0_36, %c0_37] : memref<100x18xbf16, #tpu.memory_space<vmem>>, vector<100x18xbf16>
    %cst_38 = arith.constant dense<0.000000e+00> : vector<8x18xf32>
    %67 = tpu.matmul %65, %66, %cst_38 {dimension_numbers = #tpu.dot_dimension_numbers<[1], [0], [0], [1], [0, 0, 1, 1], [], []>} : vector<8x100xbf16>, vector<100x18xbf16>, vector<8x18xf32> -> vector<8x18xf32>
    %c0_39 = arith.constant 0 : index
    %c0_40 = arith.constant 0 : index
    %68 = vector.load %arg7[%c0_39, %c0_40] : memref<1x18xf32, #tpu.memory_space<vmem>>, vector<1x18xf32>
    %69 = vector.broadcast %68 : vector<1x18xf32> to vector<8x18xf32>
    %70 = arith.addf %67, %69 : vector<8x18xf32>
    %c0_41 = arith.constant 0 : index
    %c0_42 = arith.constant 0 : index
    %71 = vector.load %arg8[%c0_41, %c0_42] : memref<8x18xf32, #tpu.memory_space<vmem>>, vector<8x18xf32>
    tpu.vector_store %arg8[%c0_41, %c0_42], %70 {strides = array<i32>} : memref<8x18xf32, #tpu.memory_space<vmem>>, vector<8x18xf32>,
    return
  }
  func.func @transform_0(%arg0: i32) -> (i32, i32) {
    %c0_i32 = arith.constant 0 : i32
    %c0_i32_0 = arith.constant 0 : i32
    return %arg0, %c0_i32 : i32, i32
  }
  func.func @transform_1(%arg0: i32) -> (i32, i32) {
    %c0_i32 = arith.constant 0 : i32
    %c0_i32_0 = arith.constant 0 : i32
    %c0_i32_1 = arith.constant 0 : i32
    return %c0_i32, %c0_i32_0 : i32, i32
  }
  func.func @transform_2(%arg0: i32) -> (i32, i32, i32) {
    %c0_i32 = arith.constant 0 : i32
    %c0_i32_0 = arith.constant 0 : i32
    %c0_i32_1 = arith.constant 0 : i32
    %c0_i32_2 = arith.constant 0 : i32
    return %c0_i32, %c0_i32_0, %c0_i32_1 : i32, i32, i32
  }
  func.func @transform_3(%arg0: i32) -> (i32, i32) {
    %c0_i32 = arith.constant 0 : i32
    %c0_i32_0 = arith.constant 0 : i32
    %c0_i32_1 = arith.constant 0 : i32
    return %c0_i32, %c0_i32_0 : i32, i32
  }
  func.func @transform_4(%arg0: i32) -> (i32, i32) {
    %c0_i32 = arith.constant 0 : i32
    %c0_i32_0 = arith.constant 0 : i32
    %c0_i32_1 = arith.constant 0 : i32
    return %c0_i32, %c0_i32_0 : i32, i32
  }
  func.func @transform_5(%arg0: i32) -> (i32, i32) {
    %c0_i32 = arith.constant 0 : i32
    %c0_i32_0 = arith.constant 0 : i32
    %c0_i32_1 = arith.constant 0 : i32
    return %c0_i32, %c0_i32_0 : i32, i32
  }
  func.func @transform_6(%arg0: i32) -> (i32, i32) {
    %c0_i32 = arith.constant 0 : i32
    %c0_i32_0 = arith.constant 0 : i32
    %c0_i32_1 = arith.constant 0 : i32
    return %c0_i32, %c0_i32_0 : i32, i32
  }
  func.func @transform_7(%arg0: i32) -> (i32, i32) {
    %c0_i32 = arith.constant 0 : i32
    %c0_i32_0 = arith.constant 0 : i32
    return %arg0, %c0_i32 : i32, i32
  }
}

</mosaic_0001>

<llo_original>
// kernel: tpu_custom_call.1
$region0: #{tpu_custom_call.1}
  #allocation0 [shape = 'u32[]', space=smem, size = 0x4, offset = 0x4, fixed_abs, tag = 'smem constant byte address 0x4 - core index']
  #allocation1 [shape = 'u32[72,128]{1,0:T(1,128)}', space=vmem, size = 0x9000, scoped, tag = 'internal scratch']
  %s0 = inlined_call_operand.vmem [shape: f32[8,4], index: 0, kind: input, shape index: {}]
  %s1 = inlined_call_operand.vmem [shape: f32[4,100], index: 1, kind: input, shape index: {}]
  %s2 = inlined_call_operand.vmem [shape: bf16[4,100,100], index: 2, kind: input, shape index: {}]
  %s3 = inlined_call_operand.vmem [shape: bf16[100,18], index: 3, kind: input, shape index: {}]
  %s4 = inlined_call_operand.vmem [shape: f32[1,100], index: 4, kind: input, shape index: {}]
  %s5 = inlined_call_operand.vmem [shape: f32[4,100], index: 5, kind: input, shape index: {}]
  %s6 = inlined_call_operand.vmem [shape: f32[1,18], index: 6, kind: input, shape index: {}]
  %s7 = inlined_call_operand.hbm [shape: f32[8,18], index: 7, kind: output, shape index: {}]
  %s8 = sld [smem:[#allocation0]]
  $region38: #{tpu_custom_call.1} parent=0
    _
  %s10 = ssub.s32 1, %s8
  %s11 = scalar_select 0, %s10, %s8
  $region1: #{tpu_custom_call.1} parent=0
    #allocation2 [shape = 'u8[4096]{0}', space=vmem, size = 0x1000, scoped, tag = 'output window, operand 0, single buffered']
    #allocation3 [shape = 's32[1]{0}', space=sflag, size = 0x4, scoped, tag = 'scoped memory for tpu_custom_call.1']
    %12 = vsyncpa [#allocation3], 0
    // Predicated region
    $region2: #{tpu_custom_call.1} parent=1 // pred_check
      _
    $region3: #{tpu_custom_call.1} parent=1 // pred_check_branch
      %14 = sbr.rel (0) target = $region5
    $region4: #{tpu_custom_call.1} parent=1 // pred_region
      _
    $region5: #{tpu_custom_call.1} parent=1 // pred_fallthru
      _
    // Predicated region
    $region6: #{tpu_custom_call.1} parent=1 // pred_check
      _
    $region7: #{tpu_custom_call.1} parent=1 // pred_check_branch
      %16 = sbr.rel (0) target = $region9
    $region8: #{tpu_custom_call.1} parent=1 // pred_region
      _
    $region9: #{tpu_custom_call.1} parent=1 // pred_fallthru
      _
    // Predicated region
    $region10: #{tpu_custom_call.1} parent=1 // pred_check
      _
    $region11: #{tpu_custom_call.1} parent=1 // pred_check_branch
      %18 = sbr.rel (0) target = $region13
    $region12: #{tpu_custom_call.1} parent=1 // pred_region
      _
    $region13: #{tpu_custom_call.1} parent=1 // pred_fallthru
      _
    // Predicated region
    $region14: #{tpu_custom_call.1} parent=1 // pred_check
      _
    $region15: #{tpu_custom_call.1} parent=1 // pred_check_branch
      %20 = sbr.rel (0) target = $region17
    $region16: #{tpu_custom_call.1} parent=1 // pred_region
      _
    $region17: #{tpu_custom_call.1} parent=1 // pred_fallthru
      _
    // Predicated region
    $region18: #{tpu_custom_call.1} parent=1 // pred_check
      _
    $region19: #{tpu_custom_call.1} parent=1 // pred_check_branch
      %22 = sbr.rel (0) target = $region21
    $region20: #{tpu_custom_call.1} parent=1 // pred_region
      _
    $region21: #{tpu_custom_call.1} parent=1 // pred_fallthru
      _
    // Predicated region
    $region22: #{tpu_custom_call.1} parent=1 // pred_check
      _
    $region23: #{tpu_custom_call.1} parent=1 // pred_check_branch
      %24 = sbr.rel (0) target = $region25
    $region24: #{tpu_custom_call.1} parent=1 // pred_region
      _
    $region25: #{tpu_custom_call.1} parent=1 // pred_fallthru
      _
    // Predicated region
    $region26: #{tpu_custom_call.1} parent=1 // pred_check
      _
    $region27: #{tpu_custom_call.1} parent=1 // pred_check_branch
      %26 = sbr.rel (0) target = $region29
    $region28: #{tpu_custom_call.1} parent=1 // pred_region
      _
    $region29: #{tpu_custom_call.1} parent=1 // pred_fallthru
      _
    %v28 = vld [vmem:[%s0] sm:$0xff]
    %v29 = vld [vmem:[%s1] sm:$0x1]
    %31 = vset.pattern.permute.xlu0 0
    %32 = vperm.xlu0 %31, %v28
    %v33 = vpop.permute.xlu0 %32
    %v35 = vperm.slane %v29, 0
    %v36 = vmul.f32 %v33, %v35
    %v37 = vld [vmem:[%s1 + $0x1] sm:$0x1]
    %38 = vset.pattern.permute.xlu0 1
    %39 = vperm.xlu0 %38, %v28
    %v40 = vpop.permute.xlu0 %39
    %v42 = vperm.slane %v37, 0
    %v43 = vmul.f32 %v40, %v42
    %v44 = vadd.f32 %v36, %v43
    %v45 = vld [vmem:[%s1 + $0x2] sm:$0x1]
    %46 = vset.pattern.permute.xlu0 2
    %47 = vperm.xlu0 %46, %v28
    %v48 = vpop.permute.xlu0 %47
    %v50 = vperm.slane %v45, 0
    %v51 = vmul.f32 %v48, %v50
    %v52 = vadd.f32 %v44, %v51
    %v53 = vld [vmem:[%s1 + $0x3] sm:$0x1]
    %54 = vset.pattern.permute.xlu0 3
    %55 = vperm.xlu0 %54, %v28
    %v56 = vpop.permute.xlu0 %55
    %v58 = vperm.slane %v53, 0
    %v59 = vmul.f32 %v56, %v58
    %v60 = vadd.f32 %v52, %v59
    %v61 = vld [vmem:[%s4] sm:$0x1]
    %v63 = vperm.slane %v61, 0
    %v65 = vadd.f32 %v60, %v63
    %v66 = vmax.f32 %v65, 0.0
    %v67 = vpack.c.bf16 %v66, %v66
    %v68 = vld [vmem:[%s2] sm:$0xf]
    %v69 = vld [vmem:[%s2 + $0x4] sm:$0xf]
    %v70 = vld [vmem:[%s2 + $0x8] sm:$0xf]
    %v71 = vld [vmem:[%s2 + $0xc] sm:$0xf]
    %v72 = vld [vmem:[%s2 + $0x10] sm:$0xf]
    %v73 = vld [vmem:[%s2 + $0x14] sm:$0xf]
    %v74 = vld [vmem:[%s2 + $0x18] sm:$0xf]
    %v75 = vld [vmem:[%s2 + $0x1c] sm:$0xf]
    %v76 = vld [vmem:[%s2 + $0x20] sm:$0xf]
    %v77 = vld [vmem:[%s2 + $0x24] sm:$0xf]
    %v78 = vld [vmem:[%s2 + $0x28] sm:$0xf]
    %v79 = vld [vmem:[%s2 + $0x2c] sm:$0xf]
    %v80 = vld [vmem:[%s2 + $0x30] sm:$0x3]
    %v81 = vld [vmem:[%s5] sm:$0x1]
    %v82 = vperm.slane %v81, 0
    %v96 = vunpack.c.l.b16 %v68
    %v97 = vunpack.c.l.b16 %v69
    %v98 = vunpack.c.l.b16 %v70
    %v99 = vunpack.c.l.b16 %v71
    %v100 = vunpack.c.l.b16 %v72
    %v101 = vunpack.c.l.b16 %v73
    %v102 = vunpack.c.l.b16 %v74
    %v103 = vunpack.c.l.b16 %v75
    %v104 = vunpack.c.l.b16 %v76
    %v105 = vunpack.c.l.b16 %v77
    %v106 = vunpack.c.l.b16 %v78
    %v107 = vunpack.c.l.b16 %v79
    %v108 = vunpack.c.l.b16 %v80
    %v109 = vpack.c.b16 %v97, %v96
    %v110 = vpack.c.b16 %v99, %v98
    %v111 = vpack.c.b16 %v101, %v100
    %v112 = vpack.c.b16 %v103, %v102
    %v113 = vpack.c.b16 %v105, %v104
    %v114 = vpack.c.b16 %v107, %v106
    %v115 = vpack.c.b16 %v108, %v108
    %vm122 = vcmask 818176
    %v124 = vsel %vm122, %v67, 0
    %vm126 = vcmask 1041408
    %v128 = vsel %vm126, %v115, 0
    %130 = vmatpush.bf16.msra.mxu0 0
    %131 = vmatpush.bf16.msra.mxu0 %v128
    %132 = vmatpush.bf16.msra.mxu0 %v114
    %133 = vmatpush.bf16.msra.mxu0 %v113
    %134 = vmatpush.bf16.msra.mxu0 %v112
    %135 = vmatpush.bf16.msra.mxu0 %v111
    %136 = vmatpush.bf16.msra.mxu0 %v110
    %137 = vmatpush.bf16.msra.mxu0 %v109
    %138 = vmatmul.bf16.gmra.mxu0 %v124
    %v139 = vpop.f32.mrf.mxu0
    %v140 = vadd.f32 %v82, %v139
    %v141 = vpop.f32.mrf.mxu0
    %142 = vdwg.mxu0
    %v143 = vmax.f32 %v140, 0.0
    %v144 = vpack.c.bf16 %v143, %v143
    %s145 = scalar_lea.vmem %s2, 52
    %v146 = vld [vmem:[%s145] sm:$0xf]
    %v147 = vld [vmem:[%s145 + $0x4] sm:$0xf]
    %v148 = vld [vmem:[%s145 + $0x8] sm:$0xf]
    %v149 = vld [vmem:[%s145 + $0xc] sm:$0xf]
    %v150 = vld [vmem:[%s145 + $0x10] sm:$0xf]
    %v151 = vld [vmem:[%s145 + $0x14] sm:$0xf]
    %v152 = vld [vmem:[%s145 + $0x18] sm:$0xf]
    %v153 = vld [vmem:[%s145 + $0x1c] sm:$0xf]
    %v154 = vld [vmem:[%s145 + $0x20] sm:$0xf]
    %v155 = vld [vmem:[%s145 + $0x24] sm:$0xf]
    %v156 = vld [vmem:[%s145 + $0x28] sm:$0xf]
    %v157 = vld [vmem:[%s145 + $0x2c] sm:$0xf]
    %v158 = vld [vmem:[%s145 + $0x30] sm:$0x3]
    %v159 = vld [vmem:[%s5 + $0x1] sm:$0x1]
    %v160 = vperm.slane %v159, 0
    %v174 = vunpack.c.l.b16 %v146
    %v175 = vunpack.c.l.b16 %v147
    %v176 = vunpack.c.l.b16 %v148
    %v177 = vunpack.c.l.b16 %v149
    %v178 = vunpack.c.l.b16 %v150
    %v179 = vunpack.c.l.b16 %v151
    %v180 = vunpack.c.l.b16 %v152
    %v181 = vunpack.c.l.b16 %v153
    %v182 = vunpack.c.l.b16 %v154
    %v183 = vunpack.c.l.b16 %v155
    %v184 = vunpack.c.l.b16 %v156
    %v185 = vunpack.c.l.b16 %v157
    %v186 = vunpack.c.l.b16 %v158
    %v187 = vpack.c.b16 %v175, %v174
    %v188 = vpack.c.b16 %v177, %v176
    %v189 = vpack.c.b16 %v179, %v178
    %v190 = vpack.c.b16 %v181, %v180
    %v191 = vpack.c.b16 %v183, %v182
    %v192 = vpack.c.b16 %v185, %v184
    %v193 = vpack.c.b16 %v186, %v186
    %v201 = vsel %vm122, %v144, 0
    %v204 = vsel %vm126, %v193, 0
    %206 = vmatpush.bf16.msra.mxu0 0
    %207 = vmatpush.bf16.msra.mxu0 %v204
    %208 = vmatpush.bf16.msra.mxu0 %v192
    %209 = vmatpush.bf16.msra.mxu0 %v191
    %210 = vmatpush.bf16.msra.mxu0 %v190
    %211 = vmatpush.bf16.msra.mxu0 %v189
    %212 = vmatpush.bf16.msra.mxu0 %v188
    %213 = vmatpush.bf16.msra.mxu0 %v187
    %214 = vmatmul.bf16.gmra.mxu0 %v201
    %v215 = vpop.f32.mrf.mxu0
    %v216 = vadd.f32 %v160, %v215
    %v217 = vpop.f32.mrf.mxu0
    %218 = vdwg.mxu0
    %v219 = vmax.f32 %v216, 0.0
    %v220 = vpack.c.bf16 %v219, %v219
    %s221 = scalar_lea.vmem %s2, 104
    %v222 = vld [vmem:[%s221] sm:$0xf]
    %v223 = vld [vmem:[%s221 + $0x4] sm:$0xf]
    %v224 = vld [vmem:[%s221 + $0x8] sm:$0xf]
    %v225 = vld [vmem:[%s221 + $0xc] sm:$0xf]
    %v226 = vld [vmem:[%s221 + $0x10] sm:$0xf]
    %v227 = vld [vmem:[%s221 + $0x14] sm:$0xf]
    %v228 = vld [vmem:[%s221 + $0x18] sm:$0xf]
    %v229 = vld [vmem:[%s221 + $0x1c] sm:$0xf]
    %v230 = vld [vmem:[%s221 + $0x20] sm:$0xf]
    %v231 = vld [vmem:[%s221 + $0x24] sm:$0xf]
    %v232 = vld [vmem:[%s221 + $0x28] sm:$0xf]
    %v233 = vld [vmem:[%s221 + $0x2c] sm:$0xf]
    %v234 = vld [vmem:[%s221 + $0x30] sm:$0x3]
    %v235 = vld [vmem:[%s5 + $0x2] sm:$0x1]
    %v236 = vperm.slane %v235, 0
    %v250 = vunpack.c.l.b16 %v222
    %v251 = vunpack.c.l.b16 %v223
    %v252 = vunpack.c.l.b16 %v224
    %v253 = vunpack.c.l.b16 %v225
    %v254 = vunpack.c.l.b16 %v226
    %v255 = vunpack.c.l.b16 %v227
    %v256 = vunpack.c.l.b16 %v228
    %v257 = vunpack.c.l.b16 %v229
    %v258 = vunpack.c.l.b16 %v230
    %v259 = vunpack.c.l.b16 %v231
    %v260 = vunpack.c.l.b16 %v232
    %v261 = vunpack.c.l.b16 %v233
    %v262 = vunpack.c.l.b16 %v234
    %v263 = vpack.c.b16 %v251, %v250
    %v264 = vpack.c.b16 %v253, %v252
    %v265 = vpack.c.b16 %v255, %v254
    %v266 = vpack.c.b16 %v257, %v256
    %v267 = vpack.c.b16 %v259, %v258
    %v268 = vpack.c.b16 %v261, %v260
    %v269 = vpack.c.b16 %v262, %v262
    %v277 = vsel %vm122, %v220, 0
    %v280 = vsel %vm126, %v269, 0
    %282 = vmatpush.bf16.msra.mxu0 0
    %283 = vmatpush.bf16.msra.mxu0 %v280
    %284 = vmatpush.bf16.msra.mxu0 %v268
    %285 = vmatpush.bf16.msra.mxu0 %v267
    %286 = vmatpush.bf16.msra.mxu0 %v266
    %287 = vmatpush.bf16.msra.mxu0 %v265
    %288 = vmatpush.bf16.msra.mxu0 %v264
    %289 = vmatpush.bf16.msra.mxu0 %v263
    %290 = vmatmul.bf16.gmra.mxu0 %v277
    %v291 = vpop.f32.mrf.mxu0
    %v292 = vadd.f32 %v236, %v291
    %v293 = vpop.f32.mrf.mxu0
    %294 = vdwg.mxu0
    %v295 = vmax.f32 %v292, 0.0
    %v296 = vpack.c.bf16 %v295, %v295
    %s297 = scalar_lea.vmem %s2, 156
    %v298 = vld [vmem:[%s297] sm:$0xf]
    %v299 = vld [vmem:[%s297 + $0x4] sm:$0xf]
    %v300 = vld [vmem:[%s297 + $0x8] sm:$0xf]
    %v301 = vld [vmem:[%s297 + $0xc] sm:$0xf]
    %v302 = vld [vmem:[%s297 + $0x10] sm:$0xf]
    %v303 = vld [vmem:[%s297 + $0x14] sm:$0xf]
    %v304 = vld [vmem:[%s297 + $0x18] sm:$0xf]
    %v305 = vld [vmem:[%s297 + $0x1c] sm:$0xf]
    %v306 = vld [vmem:[%s297 + $0x20] sm:$0xf]
    %v307 = vld [vmem:[%s297 + $0x24] sm:$0xf]
    %v308 = vld [vmem:[%s297 + $0x28] sm:$0xf]
    %v309 = vld [vmem:[%s297 + $0x2c] sm:$0xf]
    %v310 = vld [vmem:[%s297 + $0x30] sm:$0x3]
    %v311 = vld [vmem:[%s5 + $0x3] sm:$0x1]
    %v312 = vperm.slane %v311, 0
    %v326 = vunpack.c.l.b16 %v298
    %v327 = vunpack.c.l.b16 %v299
    %v328 = vunpack.c.l.b16 %v300
    %v329 = vunpack.c.l.b16 %v301
    %v330 = vunpack.c.l.b16 %v302
    %v331 = vunpack.c.l.b16 %v303
    %v332 = vunpack.c.l.b16 %v304
    %v333 = vunpack.c.l.b16 %v305
    %v334 = vunpack.c.l.b16 %v306
    %v335 = vunpack.c.l.b16 %v307
    %v336 = vunpack.c.l.b16 %v308
    %v337 = vunpack.c.l.b16 %v309
    %v338 = vunpack.c.l.b16 %v310
    %v339 = vpack.c.b16 %v327, %v326
    %v340 = vpack.c.b16 %v329, %v328
    %v341 = vpack.c.b16 %v331, %v330
    %v342 = vpack.c.b16 %v333, %v332
    %v343 = vpack.c.b16 %v335, %v334
    %v344 = vpack.c.b16 %v337, %v336
    %v345 = vpack.c.b16 %v338, %v338
    %v353 = vsel %vm122, %v296, 0
    %v356 = vsel %vm126, %v345, 0
    %358 = vmatpush.bf16.msra.mxu0 0
    %359 = vmatpush.bf16.msra.mxu0 %v356
    %360 = vmatpush.bf16.msra.mxu0 %v344
    %361 = vmatpush.bf16.msra.mxu0 %v343
    %362 = vmatpush.bf16.msra.mxu0 %v342
    %363 = vmatpush.bf16.msra.mxu0 %v341
    %364 = vmatpush.bf16.msra.mxu0 %v340
    %365 = vmatpush.bf16.msra.mxu0 %v339
    %366 = vmatmul.bf16.gmra.mxu0 %v353
    %v367 = vpop.f32.mrf.mxu0
    %v368 = vadd.f32 %v312, %v367
    %v369 = vpop.f32.mrf.mxu0
    %370 = vdwg.mxu0
    %v371 = vmax.f32 %v368, 0.0
    %v372 = vpack.c.bf16 %v371, %v371
    %v373 = vld [vmem:[%s3] sm:$0xf]
    %v374 = vld [vmem:[%s3 + $0x4] sm:$0xf]
    %v375 = vld [vmem:[%s3 + $0x8] sm:$0xf]
    %v376 = vld [vmem:[%s3 + $0xc] sm:$0xf]
    %v377 = vld [vmem:[%s3 + $0x10] sm:$0xf]
    %v378 = vld [vmem:[%s3 + $0x14] sm:$0xf]
    %v379 = vld [vmem:[%s3 + $0x18] sm:$0xf]
    %v380 = vld [vmem:[%s3 + $0x1c] sm:$0xf]
    %v381 = vld [vmem:[%s3 + $0x20] sm:$0xf]
    %v382 = vld [vmem:[%s3 + $0x24] sm:$0xf]
    %v383 = vld [vmem:[%s3 + $0x28] sm:$0xf]
    %v384 = vld [vmem:[%s3 + $0x2c] sm:$0xf]
    %v385 = vld [vmem:[%s3 + $0x30] sm:$0x3]
    %v386 = vld [vmem:[%s6] sm:$0x1]
    %v388 = vperm.slane %v386, 0
    %v403 = vunpack.c.l.b16 %v373
    %v404 = vunpack.c.l.b16 %v374
    %v405 = vunpack.c.l.b16 %v375
    %v406 = vunpack.c.l.b16 %v376
    %v407 = vunpack.c.l.b16 %v377
    %v408 = vunpack.c.l.b16 %v378
    %v409 = vunpack.c.l.b16 %v379
    %v410 = vunpack.c.l.b16 %v380
    %v411 = vunpack.c.l.b16 %v381
    %v412 = vunpack.c.l.b16 %v382
    %v413 = vunpack.c.l.b16 %v383
    %v414 = vunpack.c.l.b16 %v384
    %v415 = vunpack.c.l.b16 %v385
    %v416 = vpack.c.b16 %v404, %v403
    %v417 = vpack.c.b16 %v406, %v405
    %v418 = vpack.c.b16 %v408, %v407
    %v419 = vpack.c.b16 %v410, %v409
    %v420 = vpack.c.b16 %v412, %v411
    %v421 = vpack.c.b16 %v414, %v413
    %v422 = vpack.c.b16 %v415, %v415
    %v430 = vsel %vm122, %v372, 0
    %v433 = vsel %vm126, %v422, 0
    %435 = vmatpush.bf16.msra.mxu0 0
    %436 = vmatpush.bf16.msra.mxu0 %v433
    %437 = vmatpush.bf16.msra.mxu0 %v421
    %438 = vmatpush.bf16.msra.mxu0 %v420
    %439 = vmatpush.bf16.msra.mxu0 %v419
    %440 = vmatpush.bf16.msra.mxu0 %v418
    %441 = vmatpush.bf16.msra.mxu0 %v417
    %442 = vmatpush.bf16.msra.mxu0 %v416
    %443 = vmatmul.bf16.gmra.mxu0 %v430
    %v444 = vpop.f32.mrf.mxu0
    %v445 = vadd.f32 %v388, %v444
    %v446 = vpop.f32.mrf.mxu0
    %447 = vdwg.mxu0
    %vm448 = vcmask 146432
    %449 = vst.msk [vmem:[#allocation2] sm:$0xff] %vm448, %v445
    // Predicated region
    $region30: #{tpu_custom_call.1} parent=1 // pred_check
      _
    $region31: #{tpu_custom_call.1} parent=1 // pred_check_branch
      %451 = sbr.rel (0) target = $region33
    $region32: #{tpu_custom_call.1} parent=1 // pred_region
      %453 = vsyncadd [#allocation3], 0
      %s455 = sshll.u32 [#allocation2], 4
      %s456 = int_to_ptr.vmem [resolvable:$true] %s455
      %s457 = sshll.u32 %s7, 4
      %s458 = int_to_ptr.hbm [resolvable:$true] %s457
      %460 = dma.vmem_to_hbm [thread:$0]  %s456, 128, %s458, [#allocation3]
    $region33: #{tpu_custom_call.1} parent=1 // pred_fallthru
      _
    // Predicated region
    $region34: #{tpu_custom_call.1} parent=1 // pred_check
      _
    $region35: #{tpu_custom_call.1} parent=1 // pred_check_branch
      %462 = sbr.rel (0) target = $region37
    $region36: #{tpu_custom_call.1} parent=1 // pred_region
      %464 = dma.done [#allocation3], 128
    $region37: #{tpu_custom_call.1} parent=1 // pred_fallthru
      _
    %465 = vsyncpa [#allocation3], 1

</llo_original>
